<compile_context>
chip_gen: v7x
topology: tpu7x:2x2x1
jax: 0.10.0
libtpu: 0.0.40
codegen_flags: <defaults>
</compile_context>

<pallas_src>
import functools

import jax
import jax.numpy as jnp
import numpy as np
from jax.experimental import pallas as pl
from jax.experimental.pallas import tpu as pltpu

HIDDEN = 64
LANES = 128          # pad hidden/action lane dims to full vreg lane width


def _round_up(x, m):
    return ((x + m - 1) // m) * m


def qnet_kernel(x_ref, w1_ref, w23_ref, b_ref, o_ref, *, compute_dtype):
    # x_ref:   (TB, S)           current batch tile
    # w1_ref:  (S, 128)          fc1 weight, lane-padded
    # w23_ref: (128, 256)        [fc2 | fc3] weights packed along lanes
    # b_ref:   (3, 128)          [b1; b2; b3] lane-padded
    # o_ref:   (TB, 128)         lane-dense output (cols A..127 are zero)
    x = x_ref[...]
    w1 = w1_ref[...]
    w2 = w23_ref[:, 0:LANES]          # static, 128-aligned slices: zero cost
    w3 = w23_ref[:, LANES:2 * LANES]
    b1 = b_ref[0:1, :]
    b2 = b_ref[1:2, :]
    b3 = b_ref[2:3, :]

    h1 = jnp.dot(x.astype(compute_dtype), w1.astype(compute_dtype),
                 preferred_element_type=jnp.float32) + b1
    h1 = jnp.maximum(h1, 0.0)
    h2 = jnp.dot(h1.astype(compute_dtype), w2.astype(compute_dtype),
                 preferred_element_type=jnp.float32) + b2
    h2 = jnp.maximum(h2, 0.0)
    out = jnp.dot(h2.astype(compute_dtype), w3.astype(compute_dtype),
                  preferred_element_type=jnp.float32) + b3
    o_ref[...] = out.astype(o_ref.dtype)


def _pack_params(params, action_size):
    """Zero-pad/pack the tiny weight & bias operands into 3 lane-dense buffers."""
    w1, b1 = params["w1"], params["b1"]
    w2, b2 = params["w2"], params["b2"]
    w3, b3 = params["w3"], params["b3"]
    S = w1.shape[0]

    w1p = jnp.zeros((S, LANES), jnp.float32).at[:, :HIDDEN].set(w1)
    w2p = jnp.zeros((LANES, LANES), jnp.float32).at[:HIDDEN, :HIDDEN].set(w2)
    w3p = jnp.zeros((LANES, LANES), jnp.float32).at[:HIDDEN, :action_size].set(w3)
    w23p = jnp.concatenate([w2p, w3p], axis=1)            # (128, 256)

    b_pack = jnp.zeros((3, LANES), jnp.float32)
    b_pack = b_pack.at[0, :HIDDEN].set(b1.reshape(-1))
    b_pack = b_pack.at[1, :HIDDEN].set(b2.reshape(-1))
    b_pack = b_pack.at[2, :action_size].set(b3.reshape(-1))
    return w1p, w23p, b_pack


def qnetwork_forward(state, params, *, block_b=1024, compute_dtype=jnp.float32):
    """state: (B, state_size) f32. params: dict of w1,b1,w2,b2,w3,b3."""
    B, S = state.shape
    A = params["w3"].shape[1]
    w1p, w23p, b_pack = _pack_params(params, A)

    # Batch tile: big enough to amortize per-step overhead, clamped for small B.
    tb = min(block_b, _round_up(B, 8))
    b_padded = _round_up(B, tb)
    if b_padded != B:
        state = jnp.pad(state, ((0, b_padded - B), (0, 0)))
    grid = (pl.cdiv(b_padded, tb),)

    flops = 2 * B * (S * HIDDEN + HIDDEN * HIDDEN + HIDDEN * A)
    bytes_accessed = 4 * (b_padded * S + w1p.size + w23p.size + b_pack.size
                          + b_padded * LANES)

    kernel = functools.partial(qnet_kernel, compute_dtype=compute_dtype)

    out = pl.pallas_call(
        kernel,
        out_shape=jax.ShapeDtypeStruct((b_padded, LANES), jnp.float32),
        grid=grid,
        in_specs=[
            pl.BlockSpec((tb, S), lambda i: (i, 0)),            # batch-tiled
            pl.BlockSpec((S, LANES), lambda i: (0, 0)),         # resident
            pl.BlockSpec((LANES, 2 * LANES), lambda i: (0, 0)), # resident
            pl.BlockSpec((3, LANES), lambda i: (0, 0)),         # resident
        ],
        out_specs=pl.BlockSpec((tb, LANES), lambda i: (i, 0)),
        compiler_params=pltpu.CompilerParams(
            dimension_semantics=("parallel",)),
        cost_estimate=pl.CostEstimate(flops=flops, transcendentals=0,
                                      bytes_accessed=bytes_accessed),
    )(state, w1p, w23p, b_pack)

    return out[:B, :A]


def init_params(key, state_size, action_size):
    """Deterministic init mimicking PyTorch nn.Linear default (U[-1/sqrt(fan_in), +])."""
    ks = jax.random.split(key, 6)

    def linear(kw, kb, fan_in, fan_out):
        bound = 1.0 / np.sqrt(fan_in)
        w = jax.random.uniform(kw, (fan_in, fan_out), jnp.float32, -bound, bound)
        b = jax.random.uniform(kb, (1, fan_out), jnp.float32, -bound, bound)
        return w, b

    w1, b1 = linear(ks[0], ks[1], state_size, HIDDEN)
    w2, b2 = linear(ks[2], ks[3], HIDDEN, HIDDEN)
    w3, b3 = linear(ks[4], ks[5], HIDDEN, action_size)
    return {"w1": w1, "b1": b1, "w2": w2, "b2": b2, "w3": w3, "b3": b3}


def qnetwork_ref(state, p):
    h1 = jnp.maximum(state @ p["w1"] + p["b1"], 0.0)
    h2 = jnp.maximum(h1 @ p["w2"] + p["b2"], 0.0)
    return h2 @ p["w3"] + p["b3"]


if __name__ == "__main__":
    key = jax.random.PRNGKey(0)
    k_param, k_state, k_state2 = jax.random.split(key, 3)

    batch, state_size, action_size = 8, 8, 4
    params = init_params(k_param, state_size, action_size)

    # Small single-tile case (grid=(1,)).
    state = jax.random.normal(k_state, (batch, state_size), jnp.float32)
    out = jax.block_until_ready(qnetwork_forward(state, params))
    ref = qnetwork_ref(state, params)
    np.testing.assert_allclose(np.asarray(out), np.asarray(ref), rtol=1e-5, atol=1e-5)

    # Multi-tile case exercising the batch grid + batch padding (40 -> 48, grid=(3,)).
    state2 = jax.random.normal(k_state2, (40, state_size), jnp.float32)
    out2 = jax.block_until_ready(qnetwork_forward(state2, params, block_b=16))
    ref2 = qnetwork_ref(state2, params)
    np.testing.assert_allclose(np.asarray(out2), np.asarray(ref2), rtol=1e-5, atol=1e-5)

    print("KERNEL_OK")
</pallas_src>

<mosaic_0001>
module attributes {stable_mosaic.version = 11 : i64} {
  func.func @qnet_kernel(%arg0: i32, %arg1: memref<8x8xf32, #tpu.memory_space<vmem>>, %arg2: memref<8x128xf32, #tpu.memory_space<vmem>>, %arg3: memref<128x256xf32, #tpu.memory_space<vmem>>, %arg4: memref<3x128xf32, #tpu.memory_space<vmem>>, %arg5: memref<8x128xf32, #tpu.memory_space<vmem>>) attributes {dimension_semantics = [#tpu.dimension_semantics<parallel>], iteration_bounds = array<i64: 1>, scalar_prefetch = 0 : i64, scratch_operands = 0 : i64, tpu.core_type = #tpu.core_type<tc>, window_params = [{transform_indices = @transform_0, window_bounds = array<i64: 8, 8>}, {pipeline_mode = #tpu.pipeline_mode<synchronous>, transform_indices = @transform_1, window_bounds = array<i64: 8, 128>}, {pipeline_mode = #tpu.pipeline_mode<synchronous>, transform_indices = @transform_2, window_bounds = array<i64: 128, 256>}, {pipeline_mode = #tpu.pipeline_mode<synchronous>, transform_indices = @transform_3, window_bounds = array<i64: 3, 128>}, {transform_indices = @transform_4, window_bounds = array<i64: 8, 128>}]} {
    %c0 = arith.constant 0 : index
    %c0_0 = arith.constant 0 : index
    %0 = vector.load %arg1[%c0, %c0_0] : memref<8x8xf32, #tpu.memory_space<vmem>>, vector<8x8xf32>
    %c0_1 = arith.constant 0 : index
    %c0_2 = arith.constant 0 : index
    %1 = vector.load %arg2[%c0_1, %c0_2] : memref<8x128xf32, #tpu.memory_space<vmem>>, vector<8x128xf32>
    %c0_3 = arith.constant 0 : index
    %c0_4 = arith.constant 0 : index
    %2 = vector.load %arg3[%c0_3, %c0_4] : memref<128x256xf32, #tpu.memory_space<vmem>>, vector<128x128xf32>
    %c0_5 = arith.constant 0 : index
    %c128 = arith.constant 128 : index
    %3 = vector.load %arg3[%c0_5, %c128] : memref<128x256xf32, #tpu.memory_space<vmem>>, vector<128x128xf32>
    %c0_6 = arith.constant 0 : index
    %c0_7 = arith.constant 0 : index
    %4 = vector.load %arg4[%c0_6, %c0_7] : memref<3x128xf32, #tpu.memory_space<vmem>>, vector<1x128xf32>
    %c1 = arith.constant 1 : index
    %c0_8 = arith.constant 0 : index
    %5 = vector.load %arg4[%c1, %c0_8] : memref<3x128xf32, #tpu.memory_space<vmem>>, vector<1x128xf32>
    %c2 = arith.constant 2 : index
    %c0_9 = arith.constant 0 : index
    %6 = vector.load %arg4[%c2, %c0_9] : memref<3x128xf32, #tpu.memory_space<vmem>>, vector<1x128xf32>
    %cst = arith.constant dense<0.000000e+00> : vector<8x128xf32>
    %7 = tpu.matmul %0, %1, %cst {dimension_numbers = #tpu.dot_dimension_numbers<[1], [0], [0], [1], [0, 0, 1, 1], [], []>} : vector<8x8xf32>, vector<8x128xf32>, vector<8x128xf32> -> vector<8x128xf32>
    %8 = vector.broadcast %4 : vector<1x128xf32> to vector<8x128xf32>
    %9 = arith.addf %7, %8 : vector<8x128xf32>
    %cst_10 = arith.constant 0.000000e+00 : f32
    %10 = vector.broadcast %cst_10 : f32 to vector<8x128xf32>
    %11 = arith.maximumf %9, %10 : vector<8x128xf32>
    %cst_11 = arith.constant dense<0.000000e+00> : vector<8x128xf32>
    %12 = tpu.matmul %11, %2, %cst_11 {dimension_numbers = #tpu.dot_dimension_numbers<[1], [0], [0], [1], [0, 0, 1, 1], [], []>} : vector<8x128xf32>, vector<128x128xf32>, vector<8x128xf32> -> vector<8x128xf32>
    %13 = vector.broadcast %5 : vector<1x128xf32> to vector<8x128xf32>
    %14 = arith.addf %12, %13 : vector<8x128xf32>
    %cst_12 = arith.constant 0.000000e+00 : f32
    %15 = vector.broadcast %cst_12 : f32 to vector<8x128xf32>
    %16 = arith.maximumf %14, %15 : vector<8x128xf32>
    %cst_13 = arith.constant dense<0.000000e+00> : vector<8x128xf32>
    %17 = tpu.matmul %16, %3, %cst_13 {dimension_numbers = #tpu.dot_dimension_numbers<[1], [0], [0], [1], [0, 0, 1, 1], [], []>} : vector<8x128xf32>, vector<128x128xf32>, vector<8x128xf32> -> vector<8x128xf32>
    %18 = vector.broadcast %6 : vector<1x128xf32> to vector<8x128xf32>
    %19 = arith.addf %17, %18 : vector<8x128xf32>
    %c0_14 = arith.constant 0 : index
    %c0_15 = arith.constant 0 : index
    %20 = vector.load %arg5[%c0_14, %c0_15] : memref<8x128xf32, #tpu.memory_space<vmem>>, vector<8x128xf32>
    tpu.vector_store %arg5[%c0_14, %c0_15], %19 {strides = array<i32>} : memref<8x128xf32, #tpu.memory_space<vmem>>, vector<8x128xf32>,
    return
  }
  func.func @transform_0(%arg0: i32) -> (i32, i32) {
    %c0_i32 = arith.constant 0 : i32
    %c0_i32_0 = arith.constant 0 : i32
    return %arg0, %c0_i32 : i32, i32
  }
  func.func @transform_1(%arg0: i32) -> (i32, i32) {
    %c0_i32 = arith.constant 0 : i32
    %c0_i32_0 = arith.constant 0 : i32
    %c0_i32_1 = arith.constant 0 : i32
    return %c0_i32, %c0_i32_0 : i32, i32
  }
  func.func @transform_2(%arg0: i32) -> (i32, i32) {
    %c0_i32 = arith.constant 0 : i32
    %c0_i32_0 = arith.constant 0 : i32
    %c0_i32_1 = arith.constant 0 : i32
    return %c0_i32, %c0_i32_0 : i32, i32
  }
  func.func @transform_3(%arg0: i32) -> (i32, i32) {
    %c0_i32 = arith.constant 0 : i32
    %c0_i32_0 = arith.constant 0 : i32
    %c0_i32_1 = arith.constant 0 : i32
    return %c0_i32, %c0_i32_0 : i32, i32
  }
  func.func @transform_4(%arg0: i32) -> (i32, i32) {
    %c0_i32 = arith.constant 0 : i32
    %c0_i32_0 = arith.constant 0 : i32
    return %arg0, %c0_i32 : i32, i32
  }
}

</mosaic_0001>

<llo_original>
// kernel: tpu_custom_call.1
$region0: #{tpu_custom_call.1}
  #allocation0 [shape = 'u32[]', space=smem, size = 0x4, offset = 0x4, fixed_abs, tag = 'smem constant byte address 0x4 - core index']
  #allocation1 [shape = 'u32[144,128]{1,0:T(1,128)}', space=vmem, size = 0x12000, scoped, tag = 'internal scratch']
  %s0 = inlined_call_operand.hbm [shape: f32[8,8], index: 0, kind: input, shape index: {}]
  %s1 = inlined_call_operand.hbm [shape: f32[8,128], index: 1, kind: input, shape index: {}]
  %s2 = inlined_call_operand.hbm [shape: f32[128,256], index: 2, kind: input, shape index: {}]
  %s3 = inlined_call_operand.vmem [shape: f32[3,128], index: 3, kind: input, shape index: {}]
  %s4 = inlined_call_operand.hbm [shape: f32[8,128], index: 4, kind: output, shape index: {}]
  %s5 = sld [smem:[#allocation0]]
  $region38: #{tpu_custom_call.1} parent=0
    _
  %s7 = ssub.s32 1, %s5
  %s8 = scalar_select 0, %s7, %s5
  $region1: #{tpu_custom_call.1} parent=0
    #allocation2 [shape = 'u8[4096]{0}', space=vmem, size = 0x1000, scoped, tag = 'input window, operand 0, single buffered']
    #allocation3 [shape = 's32[1]{0}', space=sflag, size = 0x4, scoped, tag = 'scoped memory for tpu_custom_call.1']
    #allocation4 [shape = 's32[1]{0}', space=sflag, size = 0x4, scoped, tag = 'scoped memory for tpu_custom_call.1']
    #allocation5 [shape = 'u8[4096]{0}', space=vmem, size = 0x1000, scoped, tag = 'input window, operand 1, single buffered']
    #allocation6 [shape = 's32[1]{0}', space=sflag, size = 0x4, scoped, tag = 'scoped memory for tpu_custom_call.1']
    #allocation7 [shape = 'u8[131072]{0}', space=vmem, size = 0x20000, scoped, tag = 'input window, operand 2, single buffered']
    #allocation8 [shape = 'u8[4096]{0}', space=vmem, size = 0x1000, scoped, tag = 'output window, operand 0, single buffered']
    %9 = vsyncpa [#allocation3], 0
    %10 = vsyncpa [#allocation6], 0
    %11 = vsyncpa [#allocation4], 0
    // Predicated region
    $region2: #{tpu_custom_call.1} parent=1 // pred_check
      _
    $region3: #{tpu_custom_call.1} parent=1 // pred_check_branch
      %13 = sbr.rel (0) target = $region5
    $region4: #{tpu_custom_call.1} parent=1 // pred_region
      %s15 = ssub.s32 128, 128
      %16 = vsyncadd [#allocation3], %s15
      %s18 = sshll.u32 [#allocation2], 4
      %s19 = int_to_ptr.vmem [resolvable:$true] %s18
      %21 = dma.hbm_to_vmem [thread:$0]  %s0, 128, %s19, [#allocation3]
    $region5: #{tpu_custom_call.1} parent=1 // pred_fallthru
      _
    // Predicated region
    $region6: #{tpu_custom_call.1} parent=1 // pred_check
      _
    $region7: #{tpu_custom_call.1} parent=1 // pred_check_branch
      %23 = sbr.rel (0) target = $region9
    $region8: #{tpu_custom_call.1} parent=1 // pred_region
      %s25 = ssub.s32 128, 128
      %26 = vsyncadd [#allocation6], %s25
      %s28 = sshll.u32 [#allocation5], 4
      %s29 = int_to_ptr.vmem [resolvable:$true] %s28
      %31 = dma.hbm_to_vmem [thread:$0]  %s1, 128, %s29, [#allocation6]
    $region9: #{tpu_custom_call.1} parent=1 // pred_fallthru
      _
    // Predicated region
    $region10: #{tpu_custom_call.1} parent=1 // pred_check
      _
    $region11: #{tpu_custom_call.1} parent=1 // pred_check_branch
      %33 = sbr.rel (0) target = $region13
    $region12: #{tpu_custom_call.1} parent=1 // pred_region
      %s35 = ssub.s32 4096, 4096
      %36 = vsyncadd [#allocation6], %s35
      %s37 = sshll.u32 [#allocation7], 4
      %s38 = int_to_ptr.vmem [resolvable:$true] %s37
      %43 = dma.hbm_to_vmem [thread:$0]  %s2, 4096, %s38, [#allocation6], 256, 256, 16
    $region13: #{tpu_custom_call.1} parent=1 // pred_fallthru
      _
    // Predicated region
    $region14: #{tpu_custom_call.1} parent=1 // pred_check
      _
    $region15: #{tpu_custom_call.1} parent=1 // pred_check_branch
      %45 = sbr.rel (0) target = $region17
    $region16: #{tpu_custom_call.1} parent=1 // pred_region
      _
    $region17: #{tpu_custom_call.1} parent=1 // pred_fallthru
      _
    // Predicated region
    $region18: #{tpu_custom_call.1} parent=1 // pred_check
      _
    $region19: #{tpu_custom_call.1} parent=1 // pred_check_branch
      %47 = sbr.rel (0) target = $region21
    $region20: #{tpu_custom_call.1} parent=1 // pred_region
      %48 = dma.done [#allocation3], 128
    $region21: #{tpu_custom_call.1} parent=1 // pred_fallthru
      _
    // Predicated region
    $region22: #{tpu_custom_call.1} parent=1 // pred_check
      _
    $region23: #{tpu_custom_call.1} parent=1 // pred_check_branch
      %50 = sbr.rel (0) target = $region25
    $region24: #{tpu_custom_call.1} parent=1 // pred_region
      %51 = dma.done [#allocation6], 128
    $region25: #{tpu_custom_call.1} parent=1 // pred_fallthru
      _
    // Predicated region
    $region26: #{tpu_custom_call.1} parent=1 // pred_check
      _
    $region27: #{tpu_custom_call.1} parent=1 // pred_check_branch
      %53 = sbr.rel (0) target = $region29
    $region28: #{tpu_custom_call.1} parent=1 // pred_region
      %54 = dma.done [#allocation6], 4096
    $region29: #{tpu_custom_call.1} parent=1 // pred_fallthru
      _
    %v55 = vld [vmem:[#allocation2] sm:$0xff]
    %v56 = vld [vmem:[#allocation5] sm:$0xff]
    %v57 = vld [vmem:[#allocation7] sm:$0xff]
    %v58 = vld [vmem:[#allocation7 + $0x10] sm:$0xff]
    %v59 = vld [vmem:[#allocation7 + $0x20] sm:$0xff]
    %v60 = vld [vmem:[#allocation7 + $0x30] sm:$0xff]
    %v61 = vld [vmem:[#allocation7 + $0x40] sm:$0xff]
    %v62 = vld [vmem:[#allocation7 + $0x50] sm:$0xff]
    %v63 = vld [vmem:[#allocation7 + $0x60] sm:$0xff]
    %v64 = vld [vmem:[#allocation7 + $0x70] sm:$0xff]
    %v65 = vld [vmem:[#allocation7 + $0x80] sm:$0xff]
    %v66 = vld [vmem:[#allocation7 + $0x90] sm:$0xff]
    %v67 = vld [vmem:[#allocation7 + $0xa0] sm:$0xff]
    %v68 = vld [vmem:[#allocation7 + $0xb0] sm:$0xff]
    %v69 = vld [vmem:[#allocation7 + $0xc0] sm:$0xff]
    %v70 = vld [vmem:[#allocation7 + $0xd0] sm:$0xff]
    %v71 = vld [vmem:[#allocation7 + $0xe0] sm:$0xff]
    %v72 = vld [vmem:[#allocation7 + $0xf0] sm:$0xff]
    %v73 = vld [vmem:[#allocation7 + $0x8] sm:$0xff]
    %v74 = vld [vmem:[#allocation7 + $0x18] sm:$0xff]
    %v75 = vld [vmem:[#allocation7 + $0x28] sm:$0xff]
    %v76 = vld [vmem:[#allocation7 + $0x38] sm:$0xff]
    %v77 = vld [vmem:[#allocation7 + $0x48] sm:$0xff]
    %v78 = vld [vmem:[#allocation7 + $0x58] sm:$0xff]
    %v79 = vld [vmem:[#allocation7 + $0x68] sm:$0xff]
    %v80 = vld [vmem:[#allocation7 + $0x78] sm:$0xff]
    %v81 = vld [vmem:[#allocation7 + $0x88] sm:$0xff]
    %v82 = vld [vmem:[#allocation7 + $0x98] sm:$0xff]
    %v83 = vld [vmem:[#allocation7 + $0xa8] sm:$0xff]
    %v84 = vld [vmem:[#allocation7 + $0xb8] sm:$0xff]
    %v85 = vld [vmem:[#allocation7 + $0xc8] sm:$0xff]
    %v86 = vld [vmem:[#allocation7 + $0xd8] sm:$0xff]
    %v87 = vld [vmem:[#allocation7 + $0xe8] sm:$0xff]
    %v88 = vld [vmem:[#allocation7 + $0xf8] sm:$0xff]
    %v89 = vld [vmem:[%s3] sm:$0x1]
    %v90 = vld [vmem:[%s3 + $0x1] sm:$0x1]
    %v91 = vld [vmem:[%s3 + $0x2] sm:$0x1]
    %v92 = vlaneseq
    %v93 = vshrl.u32 %v92, 7
    %v94 = vsub.s32 0, %v93
    %v95 = vrot.slane %v89, %v94
    %vm96 = vcmask 64512
    %v98 = vsel %vm96, %v55, 0
    %100 = vmatprep.subr.mxu0 0.0
    %101 = vmatpush1.msra.mxu0 %v56
    %102 = vmatprep.subr.mxu0 0.0
    %103 = vmatpush1.msra.mxu0 0.0
    %104 = vmatprep.subr.mxu0 0.0
    %105 = vmatpush1.msra.mxu0 0.0
    %106 = vmatprep.subr.mxu0 0.0
    %107 = vmatpush1.msra.mxu0 0.0
    %108 = vmatprep.subr.mxu0 0.0
    %109 = vmatpush1.msra.mxu0 0.0
    %110 = vmatprep.subr.mxu0 0.0
    %111 = vmatpush1.msra.mxu0 0.0
    %112 = vmatprep.subr.mxu0 0.0
    %113 = vmatpush1.msra.mxu0 0.0
    %114 = vmatprep.subr.mxu0 0.0
    %115 = vmatpush1.msra.mxu0 0.0
    %116 = vmatprep.subr.mxu0 0.0
    %117 = vmatpush1.msra.mxu0 0.0
    %118 = vmatprep.subr.mxu0 0.0
    %119 = vmatpush1.msra.mxu0 0.0
    %120 = vmatprep.subr.mxu0 0.0
    %121 = vmatpush1.msra.mxu0 0.0
    %122 = vmatprep.subr.mxu0 0.0
    %123 = vmatpush1.msra.mxu0 0.0
    %124 = vmatprep.subr.mxu0 0.0
    %125 = vmatpush1.msra.mxu0 0.0
    %126 = vmatprep.subr.mxu0 0.0
    %127 = vmatpush1.msra.mxu0 0.0
    %128 = vmatprep.subr.mxu0 0.0
    %129 = vmatpush1.msra.mxu0 0.0
    %130 = vmatprep.subr.mxu0 0.0
    %131 = vmatpush1.msra.mxu0 0.0
    %132 = vmatprep.subr.mxu0 0.0
    %133 = vmatpush1.msra.mxu0 0.0
    %134 = vmatprep.subr.mxu0 0.0
    %135 = vmatpush1.msra.mxu0 0.0
    %136 = vmatprep.subr.mxu0 0.0
    %137 = vmatpush1.msra.mxu0 0.0
    %138 = vmatprep.subr.mxu0 0.0
    %139 = vmatpush1.msra.mxu0 0.0
    %140 = vmatprep.subr.mxu0 0.0
    %141 = vmatpush1.msra.mxu0 0.0
    %142 = vmatprep.subr.mxu0 0.0
    %143 = vmatpush1.msra.mxu0 0.0
    %144 = vmatprep.subr.mxu0 0.0
    %145 = vmatpush1.msra.mxu0 0.0
    %146 = vmatprep.subr.mxu0 0.0
    %147 = vmatpush1.msra.mxu0 0.0
    %148 = vmatprep.subr.mxu0 0.0
    %149 = vmatpush1.msra.mxu0 0.0
    %150 = vmatprep.subr.mxu0 0.0
    %151 = vmatpush1.msra.mxu0 0.0
    %152 = vmatprep.subr.mxu0 0.0
    %153 = vmatpush1.msra.mxu0 0.0
    %154 = vmatprep.subr.mxu0 0.0
    %155 = vmatpush1.msra.mxu0 0.0
    %156 = vmatprep.subr.mxu0 0.0
    %157 = vmatpush1.msra.mxu0 0.0
    %158 = vmatprep.subr.mxu0 0.0
    %159 = vmatpush1.msra.mxu0 0.0
    %160 = vmatprep.subr.mxu0 0.0
    %161 = vmatpush1.msra.mxu0 0.0
    %162 = vmatprep.subr.mxu0 0.0
    %163 = vmatpush1.msra.mxu0 0.0
    %164 = vmatprep.mubr.f32.mxu0 0.0
    %165 = vmatmul.mubr.f32.gmra.mrb[0].mxu0 %v98
    %v166 = vpop.f32.mrb[0].mxu0
    %v167 = vadd.f32 %v95, %v166
    %v168 = vpop.f32.mrb[0].mxu0
    %169 = vdwg.mxu0
    %v170 = vmax.f32 %v167, 0.0
    %v171 = vlaneseq
    %v172 = vshrl.u32 %v171, 7
    %v173 = vsub.s32 0, %v172
    %v174 = vrot.slane %v90, %v173
    %175 = vmatprep.subr.mxu0 0.0
    %176 = vmatpush1.msra.mxu0 %v57
    %177 = vmatprep.subr.mxu0 0.0
    %178 = vmatpush1.msra.mxu0 %v58
    %179 = vmatprep.subr.mxu0 0.0
    %180 = vmatpush1.msra.mxu0 %v59
    %181 = vmatprep.subr.mxu0 0.0
    %182 = vmatpush1.msra.mxu0 %v60
    %183 = vmatprep.subr.mxu0 0.0
    %184 = vmatpush1.msra.mxu0 %v61
    %185 = vmatprep.subr.mxu0 0.0
    %186 = vmatpush1.msra.mxu0 %v62
    %187 = vmatprep.subr.mxu0 0.0
    %188 = vmatpush1.msra.mxu0 %v63
    %189 = vmatprep.subr.mxu0 0.0
    %190 = vmatpush1.msra.mxu0 %v64
    %191 = vmatprep.subr.mxu0 0.0
    %192 = vmatpush1.msra.mxu0 %v65
    %193 = vmatprep.subr.mxu0 0.0
    %194 = vmatpush1.msra.mxu0 %v66
    %195 = vmatprep.subr.mxu0 0.0
    %196 = vmatpush1.msra.mxu0 %v67
    %197 = vmatprep.subr.mxu0 0.0
    %198 = vmatpush1.msra.mxu0 %v68
    %199 = vmatprep.subr.mxu0 0.0
    %200 = vmatpush1.msra.mxu0 %v69
    %201 = vmatprep.subr.mxu0 0.0
    %202 = vmatpush1.msra.mxu0 %v70
    %203 = vmatprep.subr.mxu0 0.0
    %204 = vmatpush1.msra.mxu0 %v71
    %205 = vmatprep.subr.mxu0 0.0
    %206 = vmatpush1.msra.mxu0 %v72
    %207 = vmatprep.subr.mxu0 0.0
    %208 = vmatpush1.msra.mxu0 0.0
    %209 = vmatprep.subr.mxu0 0.0
    %210 = vmatpush1.msra.mxu0 0.0
    %211 = vmatprep.subr.mxu0 0.0
    %212 = vmatpush1.msra.mxu0 0.0
    %213 = vmatprep.subr.mxu0 0.0
    %214 = vmatpush1.msra.mxu0 0.0
    %215 = vmatprep.subr.mxu0 0.0
    %216 = vmatpush1.msra.mxu0 0.0
    %217 = vmatprep.subr.mxu0 0.0
    %218 = vmatpush1.msra.mxu0 0.0
    %219 = vmatprep.subr.mxu0 0.0
    %220 = vmatpush1.msra.mxu0 0.0
    %221 = vmatprep.subr.mxu0 0.0
    %222 = vmatpush1.msra.mxu0 0.0
    %223 = vmatprep.subr.mxu0 0.0
    %224 = vmatpush1.msra.mxu0 0.0
    %225 = vmatprep.subr.mxu0 0.0
    %226 = vmatpush1.msra.mxu0 0.0
    %227 = vmatprep.subr.mxu0 0.0
    %228 = vmatpush1.msra.mxu0 0.0
    %229 = vmatprep.subr.mxu0 0.0
    %230 = vmatpush1.msra.mxu0 0.0
    %231 = vmatprep.subr.mxu0 0.0
    %232 = vmatpush1.msra.mxu0 0.0
    %233 = vmatprep.subr.mxu0 0.0
    %234 = vmatpush1.msra.mxu0 0.0
    %235 = vmatprep.subr.mxu0 0.0
    %236 = vmatpush1.msra.mxu0 0.0
    %237 = vmatprep.subr.mxu0 0.0
    %238 = vmatpush1.msra.mxu0 0.0
    %239 = vmatprep.mubr.f32.mxu0 0.0
    %240 = vmatmul.mubr.f32.gmra.mrb[0].mxu0 %v170
    %v241 = vpop.f32.mrb[0].mxu0
    %v242 = vadd.f32 %v174, %v241
    %v243 = vpop.f32.mrb[0].mxu0
    %244 = vdwg.mxu0
    %v245 = vmax.f32 %v242, 0.0
    %v246 = vlaneseq
    %v247 = vshrl.u32 %v246, 7
    %v248 = vsub.s32 0, %v247
    %v249 = vrot.slane %v91, %v248
    %250 = vmatprep.subr.mxu0 0.0
    %251 = vmatpush1.msra.mxu0 %v73
    %252 = vmatprep.subr.mxu0 0.0
    %253 = vmatpush1.msra.mxu0 %v74
    %254 = vmatprep.subr.mxu0 0.0
    %255 = vmatpush1.msra.mxu0 %v75
    %256 = vmatprep.subr.mxu0 0.0
    %257 = vmatpush1.msra.mxu0 %v76
    %258 = vmatprep.subr.mxu0 0.0
    %259 = vmatpush1.msra.mxu0 %v77
    %260 = vmatprep.subr.mxu0 0.0
    %261 = vmatpush1.msra.mxu0 %v78
    %262 = vmatprep.subr.mxu0 0.0
    %263 = vmatpush1.msra.mxu0 %v79
    %264 = vmatprep.subr.mxu0 0.0
    %265 = vmatpush1.msra.mxu0 %v80
    %266 = vmatprep.subr.mxu0 0.0
    %267 = vmatpush1.msra.mxu0 %v81
    %268 = vmatprep.subr.mxu0 0.0
    %269 = vmatpush1.msra.mxu0 %v82
    %270 = vmatprep.subr.mxu0 0.0
    %271 = vmatpush1.msra.mxu0 %v83
    %272 = vmatprep.subr.mxu0 0.0
    %273 = vmatpush1.msra.mxu0 %v84
    %274 = vmatprep.subr.mxu0 0.0
    %275 = vmatpush1.msra.mxu0 %v85
    %276 = vmatprep.subr.mxu0 0.0
    %277 = vmatpush1.msra.mxu0 %v86
    %278 = vmatprep.subr.mxu0 0.0
    %279 = vmatpush1.msra.mxu0 %v87
    %280 = vmatprep.subr.mxu0 0.0
    %281 = vmatpush1.msra.mxu0 %v88
    %282 = vmatprep.subr.mxu0 0.0
    %283 = vmatpush1.msra.mxu0 0.0
    %284 = vmatprep.subr.mxu0 0.0
    %285 = vmatpush1.msra.mxu0 0.0
    %286 = vmatprep.subr.mxu0 0.0
    %287 = vmatpush1.msra.mxu0 0.0
    %288 = vmatprep.subr.mxu0 0.0
    %289 = vmatpush1.msra.mxu0 0.0
    %290 = vmatprep.subr.mxu0 0.0
    %291 = vmatpush1.msra.mxu0 0.0
    %292 = vmatprep.subr.mxu0 0.0
    %293 = vmatpush1.msra.mxu0 0.0
    %294 = vmatprep.subr.mxu0 0.0
    %295 = vmatpush1.msra.mxu0 0.0
    %296 = vmatprep.subr.mxu0 0.0
    %297 = vmatpush1.msra.mxu0 0.0
    %298 = vmatprep.subr.mxu0 0.0
    %299 = vmatpush1.msra.mxu0 0.0
    %300 = vmatprep.subr.mxu0 0.0
    %301 = vmatpush1.msra.mxu0 0.0
    %302 = vmatprep.subr.mxu0 0.0
    %303 = vmatpush1.msra.mxu0 0.0
    %304 = vmatprep.subr.mxu0 0.0
    %305 = vmatpush1.msra.mxu0 0.0
    %306 = vmatprep.subr.mxu0 0.0
    %307 = vmatpush1.msra.mxu0 0.0
    %308 = vmatprep.subr.mxu0 0.0
    %309 = vmatpush1.msra.mxu0 0.0
    %310 = vmatprep.subr.mxu0 0.0
    %311 = vmatpush1.msra.mxu0 0.0
    %312 = vmatprep.subr.mxu0 0.0
    %313 = vmatpush1.msra.mxu0 0.0
    %314 = vmatprep.mubr.f32.mxu0 0.0
    %315 = vmatmul.mubr.f32.gmra.mrb[0].mxu0 %v245
    %v316 = vpop.f32.mrb[0].mxu0
    %v317 = vadd.f32 %v249, %v316
    %v318 = vpop.f32.mrb[0].mxu0
    %319 = vdwg.mxu0
    %320 = vst [vmem:[#allocation8] sm:$0xff] %v317
    // Predicated region
    $region30: #{tpu_custom_call.1} parent=1 // pred_check
      _
    $region31: #{tpu_custom_call.1} parent=1 // pred_check_branch
      %322 = sbr.rel (0) target = $region33
    $region32: #{tpu_custom_call.1} parent=1 // pred_region
      %s324 = ssub.s32 128, 128
      %325 = vsyncadd [#allocation4], %s324
      %s327 = sshll.u32 [#allocation8], 4
      %s328 = int_to_ptr.vmem [resolvable:$true] %s327
      %330 = dma.vmem_to_hbm [thread:$0]  %s328, 128, %s4, [#allocation4]
    $region33: #{tpu_custom_call.1} parent=1 // pred_fallthru
      _
    // Predicated region
    $region34: #{tpu_custom_call.1} parent=1 // pred_check
      _
    $region35: #{tpu_custom_call.1} parent=1 // pred_check_branch
      %332 = sbr.rel (0) target = $region37
    $region36: #{tpu_custom_call.1} parent=1 // pred_region
      %333 = dma.done [#allocation4], 128
    $region37: #{tpu_custom_call.1} parent=1 // pred_fallthru
      _
    %334 = vsyncpa [#allocation3], 1
    %335 = vsyncpa [#allocation6], 1
    %336 = vsyncpa [#allocation4], 1

</llo_original>
